<compile_context>
chip_gen: v6e
topology: v6e:2x2x1
jax: 0.10.0
libtpu: 0.0.40
codegen_flags: <defaults>
</compile_context>

<pallas_src>
import jax
import jax.numpy as jnp
from jax.experimental import pallas as pl
from jax.experimental.pallas import tpu as pltpu


# ---------------------------------------------------------------------------
# Zero-copy path: feature output aliases the input; kernel only emits the
# (constant zero) logabsdet block.
# ---------------------------------------------------------------------------
def _tmap_alias_kernel(x_hbm_ref, y_hbm_ref, lad_ref):
    # Features never move: y_hbm_ref aliases x_hbm_ref (input_output_aliases)
    # and both live in HBM (pl.ANY) -> no DMA for the identity pass-through.
    del x_hbm_ref, y_hbm_ref
    # CompositeTransform([IdentityTransform()]) contributes logabsdet == 0.
    lad_ref[...] = jnp.zeros_like(lad_ref)


def potential_tmap(x_nchw: jax.Array):
    """Potential.Tmap == CompositeTransform([IdentityTransform()]).

    Returns:
      outputs:   (B, C, H, W), identical to the input (aliased buffer).
      logabsdet: (B,) float32 zeros.
    """
    B = x_nchw.shape[0]
    lad_rows = ((B + 7) // 8) * 8      # sublane-aligned rows
    lad_lanes = 128                    # lane-dense -> unmasked full-width vst

    y, lad2d = pl.pallas_call(
        _tmap_alias_kernel,
        out_shape=(
            jax.ShapeDtypeStruct(x_nchw.shape, x_nchw.dtype),
            jax.ShapeDtypeStruct((lad_rows, lad_lanes), jnp.float32),
        ),
        grid=(1,),
        in_specs=[pl.BlockSpec(memory_space=pl.ANY)],
        out_specs=(
            pl.BlockSpec(memory_space=pl.ANY),
            pl.BlockSpec((lad_rows, lad_lanes), lambda i: (0, 0)),
        ),
        input_output_aliases={0: 0},   # feature output == feature input buffer
        compiler_params=pltpu.CompilerParams(
            dimension_semantics=("arbitrary",)
        ),
    )(x_nchw)

    return y, lad2d[:B, 0]


# ---------------------------------------------------------------------------
# Fallback path: pipelined lane-dense tiled identity copy (no aliasing).
# ---------------------------------------------------------------------------
_LANES = 512       # output last dim: large multiple of 128 -> unmasked stores
_ROW_TILE = 1024   # 1024 x 512 x 4 B = 2 MiB / block; 4 double-buffered
                   # buffers (in+out) = 8 MiB -> fits v5e 16 MiB scoped VMEM


def _tiled_copy_kernel(x_ref, y_ref):
    y_ref[...] = x_ref[...]


def potential_tmap_copy(x_nchw: jax.Array):
    """Non-aliased fallback: tiled, pipelined identity copy + zero logabsdet."""
    B = x_nchw.shape[0]
    total = x_nchw.size
    dtype = x_nchw.dtype

    # Lane/sublane-dense slab: rows % 8 == 0, lanes == 512 (multiple of 128).
    pad_unit = 8 * _LANES
    padded = ((total + pad_unit - 1) // pad_unit) * pad_unit
    x_flat = x_nchw.reshape(-1)
    if padded != total:
        x_flat = jnp.pad(x_flat, (0, padded - total))
    rows = padded // _LANES
    x2d = x_flat.reshape(rows, _LANES)

    row_tile = min(rows, _ROW_TILE)
    grid = (pl.cdiv(rows, row_tile),)

    out2d = pl.pallas_call(
        _tiled_copy_kernel,
        out_shape=jax.ShapeDtypeStruct((rows, _LANES), dtype),
        grid=grid,
        in_specs=[pl.BlockSpec((row_tile, _LANES), lambda i: (i, 0))],
        out_specs=pl.BlockSpec((row_tile, _LANES), lambda i: (i, 0)),
        compiler_params=pltpu.CompilerParams(
            dimension_semantics=("parallel",)   # shard copy across TCs (v7x)
        ),
    )(x2d)

    outputs = out2d.reshape(-1)[:total].reshape(x_nchw.shape)
    # Constant-zero logabsdet: produced wrapper-side (no kernel output needed).
    logabsdet = jnp.zeros((B,), jnp.float32)
    return outputs, logabsdet


if __name__ == "__main__":
    key = jax.random.PRNGKey(0)
    # Small NCHW shape consistent with a potential-flow input.
    x = jax.random.normal(key, (2, 4, 16, 16), dtype=jnp.float32)

    # 1) Zero-copy aliased path.
    y, lad = potential_tmap(x)
    jax.block_until_ready((y, lad))
    assert y.shape == x.shape
    assert lad.shape == (x.shape[0],)
    assert bool(jnp.allclose(y, x))
    assert bool(jnp.allclose(lad, jnp.zeros_like(lad)))

    # 2) Tiled-copy fallback path.
    y2, lad2 = potential_tmap_copy(x)
    jax.block_until_ready((y2, lad2))
    assert y2.shape == x.shape
    assert lad2.shape == (x.shape[0],)
    assert bool(jnp.allclose(y2, x))
    assert bool(jnp.allclose(lad2, jnp.zeros_like(lad2)))

    print("KERNEL_OK")
</pallas_src>

<mosaic_0001>
module attributes {stable_mosaic.version = 11 : i64} {
  func.func @_tmap_alias_kernel(%arg0: i32, %arg1: memref<2x4x16x16xf32, #tpu.memory_space<any>>, %arg2: memref<2x4x16x16xf32, #tpu.memory_space<any>>, %arg3: memref<8x128xf32, #tpu.memory_space<vmem>>) attributes {dimension_semantics = [#tpu.dimension_semantics<arbitrary>], iteration_bounds = array<i64: 1>, scalar_prefetch = 0 : i64, scratch_operands = 0 : i64, tpu.core_type = #tpu.core_type<tc>, window_params = [{}, {}, {pipeline_mode = #tpu.pipeline_mode<synchronous>, transform_indices = @transform_2, window_bounds = array<i64: 8, 128>}]} {
    %cst = arith.constant 0.000000e+00 : f32
    %0 = vector.broadcast %cst : f32 to vector<8x128xf32>
    %c0 = arith.constant 0 : index
    %c0_0 = arith.constant 0 : index
    %1 = vector.load %arg3[%c0, %c0_0] : memref<8x128xf32, #tpu.memory_space<vmem>>, vector<8x128xf32>
    tpu.vector_store %arg3[%c0, %c0_0], %0 {strides = array<i32>} : memref<8x128xf32, #tpu.memory_space<vmem>>, vector<8x128xf32>,
    return
  }
  func.func @transform_2(%arg0: i32) -> (i32, i32) {
    %c0_i32 = arith.constant 0 : i32
    %c0_i32_0 = arith.constant 0 : i32
    %c0_i32_1 = arith.constant 0 : i32
    return %c0_i32, %c0_i32_0 : i32, i32
  }
}

</mosaic_0001>

<llo_original>
// kernel: tpu_custom_call.1
$region0: #{tpu_custom_call.1}
  #allocation0 [shape = 'u32[]', space=smem, size = 0x4, offset = 0x4, fixed_abs, tag = 'smem constant byte address 0x4 - core index']
  #allocation1 [shape = 'u32[144,128]{1,0:T(1,128)}', space=vmem, size = 0x12000, scoped, tag = 'internal scratch']
  %s0 = inlined_call_operand.hbm [shape: f32[2,4,16,16], index: 0, kind: input, shape index: {}, may-alias: {0,1}]
  %s1 = inlined_call_operand.hbm [shape: f32[2,4,16,16], index: 1, kind: output, shape index: {0}, may-alias: {0,1}]
  %s2 = inlined_call_operand.hbm [shape: f32[8,128], index: 2, kind: output, shape index: {1}]
  %3 = xla_tuple %s1, %s2
  %s4 = sld [smem:[#allocation0]]
  $region10: #{tpu_custom_call.1} parent=0
    _
  %s6 = ssub.s32 1, %s4
  %s7 = scalar_select 0, %s6, %s4
  $region1: #{tpu_custom_call.1} parent=0
    #allocation2 [shape = 'u8[4096]{0}', space=vmem, size = 0x1000, scoped, tag = 'output window, operand 1, single buffered']
    #allocation3 [shape = 's32[1]{0}', space=sflag, size = 0x4, scoped, tag = 'scoped memory for tpu_custom_call.1']
    %8 = vsyncpa [#allocation3], 0
    %9 = vst [vmem:[#allocation2] sm:$0xff] 0.0
    // Predicated region
    $region2: #{tpu_custom_call.1} parent=1 // pred_check
      _
    $region3: #{tpu_custom_call.1} parent=1 // pred_check_branch
      %11 = sbr.rel (0) target = $region5
    $region4: #{tpu_custom_call.1} parent=1 // pred_region
      %s13 = ssub.s32 128, 128
      %14 = vsyncadd [#allocation3], %s13
      %s16 = sshll.u32 [#allocation2], 4
      %s17 = int_to_ptr.vmem [resolvable:$true] %s16
      %19 = dma.vmem_to_hbm [thread:$0]  %s17, 128, %s2, [#allocation3]
    $region5: #{tpu_custom_call.1} parent=1 // pred_fallthru
      _
    // Predicated region
    $region6: #{tpu_custom_call.1} parent=1 // pred_check
      _
    $region7: #{tpu_custom_call.1} parent=1 // pred_check_branch
      %21 = sbr.rel (0) target = $region9
    $region8: #{tpu_custom_call.1} parent=1 // pred_region
      %22 = dma.done [#allocation3], 128
    $region9: #{tpu_custom_call.1} parent=1 // pred_fallthru
      _
    %23 = vsyncpa [#allocation3], 1

</llo_original>
